<compile_context>
chip_gen: v7x
topology: tpu7x:2x2x1
jax: 0.10.0
libtpu: 0.0.40
codegen_flags: <defaults>
</compile_context>

<pallas_src>
import jax
import jax.numpy as jnp
from jax.experimental import pallas as pl
from jax.experimental.pallas import tpu as pltpu

INPUT_SIZE = 30
HIDDEN = 256
NUM_LAYERS = 2
OUT_DIM = 3

_VMEM = pl.BlockSpec(memory_space=pltpu.MemorySpace.VMEM)


# ----------------------------------------------------------------------------
# Kernels
# ----------------------------------------------------------------------------
def _zero_hidden_kernel(
    x_ref,      # (1, 30)      f32
    wih0_ref,   # (30, 1024)   bf16  = weight_ih_l0.T
    b0_ref,     # (1, 1024)    f32   = bias_ih_l0 + bias_hh_l0
    wih1_ref,   # (256, 1024)  bf16  = weight_ih_l1.T
    b1_ref,     # (1, 1024)    f32   = bias_ih_l1 + bias_hh_l1
    wlin_ref,   # (256, 3)     bf16  = linear1.weight.T
    blin_ref,   # (1, 3)       f32
    out_ref,    # (1, 3)       f32
    hn_ref,     # (2, 256)     f32
    cn_ref,     # (2, 256)     f32
):
    """Fast path: h_0 == c_0 == 0  ->  no recurrent matmul, no forget-gate term."""
    H = HIDDEN

    def cell(x_bf16, wih, b):
        # PyTorch gate order: i, f, g, o.  f is unused because c_prev == 0.
        gates = jnp.dot(x_bf16, wih, preferred_element_type=jnp.float32) + b
        i = jax.nn.sigmoid(gates[:, 0 * H:1 * H])
        g = jnp.tanh(gates[:, 2 * H:3 * H])
        o = jax.nn.sigmoid(gates[:, 3 * H:4 * H])
        c_new = i * g                      # f * c_prev == 0
        h_new = o * jnp.tanh(c_new)
        return h_new, c_new

    x = x_ref[...].astype(jnp.bfloat16)                     # (1, 30)
    h1, c1 = cell(x, wih0_ref[...], b0_ref[...])
    h2, c2 = cell(h1.astype(jnp.bfloat16), wih1_ref[...], b1_ref[...])

    # Single unmasked full-block stores.
    hn_ref[...] = jnp.concatenate([h1, h2], axis=0)
    cn_ref[...] = jnp.concatenate([c1, c2], axis=0)

    # Linear(256 -> 3) on out.view(1, -1) (== h2 since seq == 1).
    out_ref[...] = (
        jnp.dot(h2.astype(jnp.bfloat16), wlin_ref[...],
                preferred_element_type=jnp.float32)
        + blin_ref[...]
    )


def _general_kernel(
    x_ref,      # (1, 30)      f32
    wih0_ref,   # (30, 1024)   bf16
    whh0_ref,   # (256, 1024)  bf16
    b0_ref,     # (1, 1024)    f32
    wih1_ref,   # (256, 1024)  bf16
    whh1_ref,   # (256, 1024)  bf16
    b1_ref,     # (1, 1024)    f32
    wlin_ref,   # (256, 3)     bf16
    blin_ref,   # (1, 3)       f32
    h0_ref,     # (2, 256)     f32  initial hidden (layer-major)
    c0_ref,     # (2, 256)     f32  initial cell   (layer-major)
    out_ref,    # (1, 3)       f32
    hn_ref,     # (2, 256)     f32
    cn_ref,     # (2, 256)     f32
):
    """General path: user-provided (h_0, c_0)."""
    H = HIDDEN

    def cell(x_f32, h_prev, c_prev, wih, whh, b):
        gates = (
            jnp.dot(x_f32.astype(jnp.bfloat16), wih,
                    preferred_element_type=jnp.float32)
            + jnp.dot(h_prev.astype(jnp.bfloat16), whh,
                      preferred_element_type=jnp.float32)
            + b
        )
        i = jax.nn.sigmoid(gates[:, 0 * H:1 * H])
        f = jax.nn.sigmoid(gates[:, 1 * H:2 * H])
        g = jnp.tanh(gates[:, 2 * H:3 * H])
        o = jax.nn.sigmoid(gates[:, 3 * H:4 * H])
        c_new = f * c_prev + i * g
        h_new = o * jnp.tanh(c_new)
        return h_new, c_new

    x = x_ref[...]                                          # (1, 30) f32
    h1, c1 = cell(x, h0_ref[0:1, :], c0_ref[0:1, :],
                  wih0_ref[...], whh0_ref[...], b0_ref[...])
    h2, c2 = cell(h1, h0_ref[1:2, :], c0_ref[1:2, :],
                  wih1_ref[...], whh1_ref[...], b1_ref[...])

    hn_ref[...] = jnp.concatenate([h1, h2], axis=0)
    cn_ref[...] = jnp.concatenate([c1, c2], axis=0)
    out_ref[...] = (
        jnp.dot(h2.astype(jnp.bfloat16), wlin_ref[...],
                preferred_element_type=jnp.float32)
        + blin_ref[...]
    )


# ----------------------------------------------------------------------------
# Host-side wrapper
# ----------------------------------------------------------------------------
def init_params(key):
    """Deterministic init matching PyTorch's default shapes (U(-1/sqrt(H), 1/sqrt(H)))."""
    bound = 1.0 / jnp.sqrt(jnp.float32(HIDDEN))
    keys = jax.random.split(key, 10)
    u = lambda k, shape: jax.random.uniform(
        k, shape, dtype=jnp.float32, minval=-bound, maxval=bound)
    return {
        "w_ih_l0": u(keys[0], (4 * HIDDEN, INPUT_SIZE)),
        "w_hh_l0": u(keys[1], (4 * HIDDEN, HIDDEN)),
        "b_ih_l0": u(keys[2], (4 * HIDDEN,)),
        "b_hh_l0": u(keys[3], (4 * HIDDEN,)),
        "w_ih_l1": u(keys[4], (4 * HIDDEN, HIDDEN)),
        "w_hh_l1": u(keys[5], (4 * HIDDEN, HIDDEN)),
        "b_ih_l1": u(keys[6], (4 * HIDDEN,)),
        "b_hh_l1": u(keys[7], (4 * HIDDEN,)),
        "w_lin": u(keys[8], (OUT_DIM, HIDDEN)),
        "b_lin": u(keys[9], (OUT_DIM,)),
    }


def _prep_weights(params):
    """Pre-transpose, combine biases, and quantize matmul weights to bf16."""
    f32 = jnp.float32
    return {
        "wih0": params["w_ih_l0"].T.astype(jnp.bfloat16),          # (30, 1024)
        "whh0": params["w_hh_l0"].T.astype(jnp.bfloat16),          # (256, 1024)
        "b0": (params["b_ih_l0"] + params["b_hh_l0"]).reshape(1, 4 * HIDDEN).astype(f32),
        "wih1": params["w_ih_l1"].T.astype(jnp.bfloat16),          # (256, 1024)
        "whh1": params["w_hh_l1"].T.astype(jnp.bfloat16),          # (256, 1024)
        "b1": (params["b_ih_l1"] + params["b_hh_l1"]).reshape(1, 4 * HIDDEN).astype(f32),
        "wlin": params["w_lin"].T.astype(jnp.bfloat16),            # (256, 3)
        "blin": params["b_lin"].reshape(1, OUT_DIM).astype(f32),
    }


def dynamic_hand_model_forward(x, params, hidden=None):
    """x: (seq=1, batch=1, 30). Returns (out (1,3), (h_n (2,1,256), c_n (2,1,256)))."""
    x = x.astype(jnp.float32)
    seq, batch, in_dim = x.shape
    # The PyTorch forward only type-checks for seq==1, batch==1
    # (Linear(256,3) applied to out.view(1, -1)).
    assert seq == 1 and batch == 1 and in_dim == INPUT_SIZE

    w = _prep_weights(params)
    x2d = x.reshape(1, INPUT_SIZE)

    out_shapes = (
        jax.ShapeDtypeStruct((1, OUT_DIM), jnp.float32),
        jax.ShapeDtypeStruct((NUM_LAYERS, HIDDEN), jnp.float32),
        jax.ShapeDtypeStruct((NUM_LAYERS, HIDDEN), jnp.float32),
    )

    if hidden is None:
        # Fast path: zero initial state -> whh matrices not passed at all.
        out, hn, cn = pl.pallas_call(
            _zero_hidden_kernel,
            out_shape=out_shapes,
            in_specs=[_VMEM] * 7,
            out_specs=(_VMEM, _VMEM, _VMEM),
        )(x2d, w["wih0"], w["b0"], w["wih1"], w["b1"], w["wlin"], w["blin"])
    else:
        h_0, c_0 = hidden
        h0_2d = h_0.astype(jnp.float32).reshape(NUM_LAYERS, HIDDEN)
        c0_2d = c_0.astype(jnp.float32).reshape(NUM_LAYERS, HIDDEN)
        out, hn, cn = pl.pallas_call(
            _general_kernel,
            out_shape=out_shapes,
            in_specs=[_VMEM] * 11,
            out_specs=(_VMEM, _VMEM, _VMEM),
        )(x2d, w["wih0"], w["whh0"], w["b0"], w["wih1"], w["whh1"], w["b1"],
          w["wlin"], w["blin"], h0_2d, c0_2d)

    h_n = hn.reshape(NUM_LAYERS, 1, HIDDEN)
    c_n = cn.reshape(NUM_LAYERS, 1, HIDDEN)
    return out, (h_n, c_n)


def _reference_forward(x, params, hidden=None):
    """Pure-JAX reference mirroring the kernel's bf16-weight arithmetic."""
    w = _prep_weights(params)
    x2d = x.astype(jnp.float32).reshape(1, INPUT_SIZE)
    if hidden is None:
        h0 = jnp.zeros((NUM_LAYERS, HIDDEN), jnp.float32)
        c0 = jnp.zeros((NUM_LAYERS, HIDDEN), jnp.float32)
    else:
        h0 = hidden[0].astype(jnp.float32).reshape(NUM_LAYERS, HIDDEN)
        c0 = hidden[1].astype(jnp.float32).reshape(NUM_LAYERS, HIDDEN)
    H = HIDDEN

    def cell(xv, hp, cp, wih, whh, b):
        gates = (
            jnp.dot(xv.astype(jnp.bfloat16), wih, preferred_element_type=jnp.float32)
            + jnp.dot(hp.astype(jnp.bfloat16), whh, preferred_element_type=jnp.float32)
            + b)
        i = jax.nn.sigmoid(gates[:, 0:H])
        f = jax.nn.sigmoid(gates[:, H:2 * H])
        g = jnp.tanh(gates[:, 2 * H:3 * H])
        o = jax.nn.sigmoid(gates[:, 3 * H:4 * H])
        c = f * cp + i * g
        return o * jnp.tanh(c), c

    h1, c1 = cell(x2d, h0[0:1], c0[0:1], w["wih0"], w["whh0"], w["b0"])
    h2, c2 = cell(h1, h0[1:2], c0[1:2], w["wih1"], w["whh1"], w["b1"])
    out = (jnp.dot(h2.astype(jnp.bfloat16), w["wlin"],
                   preferred_element_type=jnp.float32) + w["blin"])
    h_n = jnp.concatenate([h1, h2], axis=0).reshape(NUM_LAYERS, 1, HIDDEN)
    c_n = jnp.concatenate([c1, c2], axis=0).reshape(NUM_LAYERS, 1, HIDDEN)
    return out, (h_n, c_n)


if __name__ == "__main__":
    key = jax.random.PRNGKey(0)
    pkey, xkey, hkey, ckey = jax.random.split(key, 4)
    params = init_params(pkey)

    # seq=1, batch=1, features=30 (the only shape the PyTorch forward accepts)
    x = jax.random.normal(xkey, (1, 1, INPUT_SIZE), dtype=jnp.float32)

    # Fast path: hidden=None (zero state) -> recurrent weights never loaded.
    out0, (h_n0, c_n0) = dynamic_hand_model_forward(x, params)
    jax.block_until_ready((out0, h_n0, c_n0))

    # General path: user-provided hidden state.
    h_in = 0.1 * jax.random.normal(hkey, (NUM_LAYERS, 1, HIDDEN), dtype=jnp.float32)
    c_in = 0.1 * jax.random.normal(ckey, (NUM_LAYERS, 1, HIDDEN), dtype=jnp.float32)
    out1, (h_n1, c_n1) = dynamic_hand_model_forward(x, params, hidden=(h_in, c_in))
    jax.block_until_ready((out1, h_n1, c_n1))

    assert out0.shape == (1, OUT_DIM) and out1.shape == (1, OUT_DIM)
    assert h_n0.shape == (NUM_LAYERS, 1, HIDDEN)
    assert c_n0.shape == (NUM_LAYERS, 1, HIDDEN)

    # Numerical sanity check against a pure-JAX reference using the same
    # bf16-quantized weights (differences limited to accumulation order).
    ref0, (rh0, rc0) = _reference_forward(x, params)
    ref1, (rh1, rc1) = _reference_forward(x, params, hidden=(h_in, c_in))
    for got, want in ((out0, ref0), (h_n0, rh0), (c_n0, rc0),
                      (out1, ref1), (h_n1, rh1), (c_n1, rc1)):
        err = float(jnp.max(jnp.abs(got - want)))
        assert err < 2e-3, f"mismatch: max abs err {err}"

    print("KERNEL_OK")
</pallas_src>

<mosaic_0001>
module attributes {stable_mosaic.version = 11 : i64} {
  func.func @_zero_hidden_kernel(%arg0: memref<1x30xf32, #tpu.memory_space<vmem>>, %arg1: memref<30x1024xbf16, #tpu.memory_space<vmem>>, %arg2: memref<1x1024xf32, #tpu.memory_space<vmem>>, %arg3: memref<256x1024xbf16, #tpu.memory_space<vmem>>, %arg4: memref<1x1024xf32, #tpu.memory_space<vmem>>, %arg5: memref<256x3xbf16, #tpu.memory_space<vmem>>, %arg6: memref<1x3xf32, #tpu.memory_space<vmem>>, %arg7: memref<1x3xf32, #tpu.memory_space<vmem>>, %arg8: memref<2x256xf32, #tpu.memory_space<vmem>>, %arg9: memref<2x256xf32, #tpu.memory_space<vmem>>) attributes {dimension_semantics = [], scalar_prefetch = 0 : i64, scratch_operands = 0 : i64, tpu.core_type = #tpu.core_type<tc>} {
    %c0 = arith.constant 0 : index
    %c0_0 = arith.constant 0 : index
    %0 = vector.load %arg0[%c0, %c0_0] : memref<1x30xf32, #tpu.memory_space<vmem>>, vector<1x30xf32>
    %1 = arith.truncf %0 : vector<1x30xf32> to vector<1x30xbf16>
    %c0_1 = arith.constant 0 : index
    %c0_2 = arith.constant 0 : index
    %2 = vector.load %arg1[%c0_1, %c0_2] : memref<30x1024xbf16, #tpu.memory_space<vmem>>, vector<30x1024xbf16>
    %c0_3 = arith.constant 0 : index
    %c0_4 = arith.constant 0 : index
    %3 = vector.load %arg2[%c0_3, %c0_4] : memref<1x1024xf32, #tpu.memory_space<vmem>>, vector<1x1024xf32>
    %cst = arith.constant dense<0.000000e+00> : vector<1x1024xf32>
    %4 = tpu.matmul %1, %2, %cst {dimension_numbers = #tpu.dot_dimension_numbers<[1], [0], [0], [1], [0, 0, 1, 1], [], []>} : vector<1x30xbf16>, vector<30x1024xbf16>, vector<1x1024xf32> -> vector<1x1024xf32>
    %5 = arith.addf %4, %3 : vector<1x1024xf32>
    %6 = vector.extract_strided_slice %5 {offsets = [0, 0], sizes = [1, 256], strides = [1, 1]} : vector<1x1024xf32> to vector<1x256xf32>
    %7 = arith.negf %6 : vector<1x256xf32>
    %8 = math.exp %7 : vector<1x256xf32>
    %cst_5 = arith.constant 1.000000e+00 : f32
    %9 = vector.broadcast %cst_5 : f32 to vector<1x256xf32>
    %10 = arith.addf %9, %8 : vector<1x256xf32>
    %11 = arith.divf %9, %10 : vector<1x256xf32>
    %12 = vector.extract_strided_slice %5 {offsets = [0, 512], sizes = [1, 256], strides = [1, 1]} : vector<1x1024xf32> to vector<1x256xf32>
    %13 = math.tanh %12 : vector<1x256xf32>
    %14 = vector.extract_strided_slice %5 {offsets = [0, 768], sizes = [1, 256], strides = [1, 1]} : vector<1x1024xf32> to vector<1x256xf32>
    %15 = arith.negf %14 : vector<1x256xf32>
    %16 = math.exp %15 : vector<1x256xf32>
    %cst_6 = arith.constant 1.000000e+00 : f32
    %17 = vector.broadcast %cst_6 : f32 to vector<1x256xf32>
    %18 = arith.addf %17, %16 : vector<1x256xf32>
    %19 = arith.divf %17, %18 : vector<1x256xf32>
    %20 = arith.mulf %11, %13 : vector<1x256xf32>
    %21 = math.tanh %20 : vector<1x256xf32>
    %22 = arith.mulf %19, %21 : vector<1x256xf32>
    %23 = arith.truncf %22 : vector<1x256xf32> to vector<1x256xbf16>
    %c0_7 = arith.constant 0 : index
    %c0_8 = arith.constant 0 : index
    %24 = vector.load %arg3[%c0_7, %c0_8] : memref<256x1024xbf16, #tpu.memory_space<vmem>>, vector<256x1024xbf16>
    %c0_9 = arith.constant 0 : index
    %c0_10 = arith.constant 0 : index
    %25 = vector.load %arg4[%c0_9, %c0_10] : memref<1x1024xf32, #tpu.memory_space<vmem>>, vector<1x1024xf32>
    %cst_11 = arith.constant dense<0.000000e+00> : vector<1x1024xf32>
    %26 = tpu.matmul %23, %24, %cst_11 {dimension_numbers = #tpu.dot_dimension_numbers<[1], [0], [0], [1], [0, 0, 1, 1], [], []>} : vector<1x256xbf16>, vector<256x1024xbf16>, vector<1x1024xf32> -> vector<1x1024xf32>
    %27 = arith.addf %26, %25 : vector<1x1024xf32>
    %28 = vector.extract_strided_slice %27 {offsets = [0, 0], sizes = [1, 256], strides = [1, 1]} : vector<1x1024xf32> to vector<1x256xf32>
    %29 = arith.negf %28 : vector<1x256xf32>
    %30 = math.exp %29 : vector<1x256xf32>
    %cst_12 = arith.constant 1.000000e+00 : f32
    %31 = vector.broadcast %cst_12 : f32 to vector<1x256xf32>
    %32 = arith.addf %31, %30 : vector<1x256xf32>
    %33 = arith.divf %31, %32 : vector<1x256xf32>
    %34 = vector.extract_strided_slice %27 {offsets = [0, 512], sizes = [1, 256], strides = [1, 1]} : vector<1x1024xf32> to vector<1x256xf32>
    %35 = math.tanh %34 : vector<1x256xf32>
    %36 = vector.extract_strided_slice %27 {offsets = [0, 768], sizes = [1, 256], strides = [1, 1]} : vector<1x1024xf32> to vector<1x256xf32>
    %37 = arith.negf %36 : vector<1x256xf32>
    %38 = math.exp %37 : vector<1x256xf32>
    %cst_13 = arith.constant 1.000000e+00 : f32
    %39 = vector.broadcast %cst_13 : f32 to vector<1x256xf32>
    %40 = arith.addf %39, %38 : vector<1x256xf32>
    %41 = arith.divf %39, %40 : vector<1x256xf32>
    %42 = arith.mulf %33, %35 : vector<1x256xf32>
    %43 = math.tanh %42 : vector<1x256xf32>
    %44 = arith.mulf %41, %43 : vector<1x256xf32>
    %45 = tpu.concatenate %22, %44 in 0 : vector<1x256xf32>, vector<1x256xf32> -> vector<2x256xf32>
    %c0_14 = arith.constant 0 : index
    %c0_15 = arith.constant 0 : index
    %46 = vector.load %arg8[%c0_14, %c0_15] : memref<2x256xf32, #tpu.memory_space<vmem>>, vector<2x256xf32>
    tpu.vector_store %arg8[%c0_14, %c0_15], %45 {strides = array<i32>} : memref<2x256xf32, #tpu.memory_space<vmem>>, vector<2x256xf32>,
    %47 = tpu.concatenate %20, %42 in 0 : vector<1x256xf32>, vector<1x256xf32> -> vector<2x256xf32>
    %c0_16 = arith.constant 0 : index
    %c0_17 = arith.constant 0 : index
    %48 = vector.load %arg9[%c0_16, %c0_17] : memref<2x256xf32, #tpu.memory_space<vmem>>, vector<2x256xf32>
    tpu.vector_store %arg9[%c0_16, %c0_17], %47 {strides = array<i32>} : memref<2x256xf32, #tpu.memory_space<vmem>>, vector<2x256xf32>,
    %49 = arith.truncf %44 : vector<1x256xf32> to vector<1x256xbf16>
    %c0_18 = arith.constant 0 : index
    %c0_19 = arith.constant 0 : index
    %50 = vector.load %arg5[%c0_18, %c0_19] : memref<256x3xbf16, #tpu.memory_space<vmem>>, vector<256x3xbf16>
    %cst_20 = arith.constant dense<0.000000e+00> : vector<1x3xf32>
    %51 = tpu.matmul %49, %50, %cst_20 {dimension_numbers = #tpu.dot_dimension_numbers<[1], [0], [0], [1], [0, 0, 1, 1], [], []>} : vector<1x256xbf16>, vector<256x3xbf16>, vector<1x3xf32> -> vector<1x3xf32>
    %c0_21 = arith.constant 0 : index
    %c0_22 = arith.constant 0 : index
    %52 = vector.load %arg6[%c0_21, %c0_22] : memref<1x3xf32, #tpu.memory_space<vmem>>, vector<1x3xf32>
    %53 = arith.addf %51, %52 : vector<1x3xf32>
    %c0_23 = arith.constant 0 : index
    %c0_24 = arith.constant 0 : index
    %54 = vector.load %arg7[%c0_23, %c0_24] : memref<1x3xf32, #tpu.memory_space<vmem>>, vector<1x3xf32>
    tpu.vector_store %arg7[%c0_23, %c0_24], %53 {strides = array<i32>} : memref<1x3xf32, #tpu.memory_space<vmem>>, vector<1x3xf32>,
    return
  }
}

</mosaic_0001>

<llo_original>
// kernel: tpu_custom_call.1
$region0: #{tpu_custom_call.1}
  #allocation0 [shape = 'u32[]', space=smem, size = 0x4, offset = 0x4, fixed_abs, tag = 'smem constant byte address 0x4 - core index']
  #allocation1 [shape = 'u32[144,128]{1,0:T(1,128)}', space=vmem, size = 0x12000, scoped, tag = 'internal scratch']
  %s0 = inlined_call_operand.vmem [shape: f32[1,30], index: 0, kind: input, shape index: {}]
  %s1 = inlined_call_operand.vmem [shape: bf16[30,1024], index: 1, kind: input, shape index: {}]
  %s2 = inlined_call_operand.vmem [shape: f32[1,1024], index: 2, kind: input, shape index: {}]
  %s3 = inlined_call_operand.hbm [shape: bf16[256,1024], index: 3, kind: input, shape index: {}]
  %s4 = inlined_call_operand.vmem [shape: f32[1,1024], index: 4, kind: input, shape index: {}]
  %s5 = inlined_call_operand.vmem [shape: bf16[256,3], index: 5, kind: input, shape index: {}]
  %s6 = inlined_call_operand.vmem [shape: f32[1,3], index: 6, kind: input, shape index: {}]
  %s7 = inlined_call_operand.hbm [shape: f32[1,3], index: 7, kind: output, shape index: {0}]
  %s8 = inlined_call_operand.hbm [shape: f32[2,256], index: 8, kind: output, shape index: {1}]
  %s9 = inlined_call_operand.hbm [shape: f32[2,256], index: 9, kind: output, shape index: {2}]
  %10 = xla_tuple %s7, %s8, %s9
  %s11 = sld [smem:[#allocation0]]
  $region58: #{tpu_custom_call.1} parent=0
    _
  %s13 = ssub.s32 1, %s11
  %s14 = scalar_select 0, %s13, %s11
  $region1: #{tpu_custom_call.1} parent=0
    #allocation2 [shape = 'u8[524288]{0}', space=vmem, size = 0x80000, scoped, tag = 'input window, operand 3, single buffered']
    #allocation3 [shape = 's32[1]{0}', space=sflag, size = 0x4, scoped, tag = 'scoped memory for tpu_custom_call.1']
    #allocation4 [shape = 's32[1]{0}', space=sflag, size = 0x4, scoped, tag = 'scoped memory for tpu_custom_call.1']
    #allocation5 [shape = 'u8[512]{0}', space=vmem, size = 0x400, scoped, tag = 'output window, operand 0, single buffered']
    #allocation6 [shape = 'u8[2048]{0}', space=vmem, size = 0x800, scoped, tag = 'output window, operand 1, single buffered']
    #allocation7 [shape = 's32[1]{0}', space=sflag, size = 0x4, scoped, tag = 'scoped memory for tpu_custom_call.1']
    #allocation8 [shape = 'u8[2048]{0}', space=vmem, size = 0x800, scoped, tag = 'output window, operand 2, single buffered']
    %15 = vsyncpa [#allocation3], 0
    %16 = vsyncpa [#allocation4], 0
    %17 = vsyncpa [#allocation7], 0
    // Predicated region
    $region2: #{tpu_custom_call.1} parent=1 // pred_check
      _
    $region3: #{tpu_custom_call.1} parent=1 // pred_check_branch
      %19 = sbr.rel (0) target = $region5
    $region4: #{tpu_custom_call.1} parent=1 // pred_region
      _
    $region5: #{tpu_custom_call.1} parent=1 // pred_fallthru
      _
    // Predicated region
    $region6: #{tpu_custom_call.1} parent=1 // pred_check
      _
    $region7: #{tpu_custom_call.1} parent=1 // pred_check_branch
      %21 = sbr.rel (0) target = $region9
    $region8: #{tpu_custom_call.1} parent=1 // pred_region
      _
    $region9: #{tpu_custom_call.1} parent=1 // pred_fallthru
      _
    // Predicated region
    $region10: #{tpu_custom_call.1} parent=1 // pred_check
      _
    $region11: #{tpu_custom_call.1} parent=1 // pred_check_branch
      %23 = sbr.rel (0) target = $region13
    $region12: #{tpu_custom_call.1} parent=1 // pred_region
      _
    $region13: #{tpu_custom_call.1} parent=1 // pred_fallthru
      _
    // Predicated region
    $region14: #{tpu_custom_call.1} parent=1 // pred_check
      _
    $region15: #{tpu_custom_call.1} parent=1 // pred_check_branch
      %25 = sbr.rel (0) target = $region17
    $region16: #{tpu_custom_call.1} parent=1 // pred_region
      %s27 = ssub.s32 16384, 16384
      %28 = vsyncadd [#allocation3], %s27
      %s29 = sshll.u32 [#allocation2], 4
      %s30 = int_to_ptr.vmem [resolvable:$true] %s29
      %35 = dma.hbm_to_vmem [thread:$0]  %s3, 16384, %s30, [#allocation3], 512, 512, 32
    $region17: #{tpu_custom_call.1} parent=1 // pred_fallthru
      _
    // Predicated region
    $region18: #{tpu_custom_call.1} parent=1 // pred_check
      _
    $region19: #{tpu_custom_call.1} parent=1 // pred_check_branch
      %37 = sbr.rel (0) target = $region21
    $region20: #{tpu_custom_call.1} parent=1 // pred_region
      _
    $region21: #{tpu_custom_call.1} parent=1 // pred_fallthru
      _
    // Predicated region
    $region22: #{tpu_custom_call.1} parent=1 // pred_check
      _
    $region23: #{tpu_custom_call.1} parent=1 // pred_check_branch
      %39 = sbr.rel (0) target = $region25
    $region24: #{tpu_custom_call.1} parent=1 // pred_region
      _
    $region25: #{tpu_custom_call.1} parent=1 // pred_fallthru
      _
    // Predicated region
    $region26: #{tpu_custom_call.1} parent=1 // pred_check
      _
    $region27: #{tpu_custom_call.1} parent=1 // pred_check_branch
      %41 = sbr.rel (0) target = $region29
    $region28: #{tpu_custom_call.1} parent=1 // pred_region
      _
    $region29: #{tpu_custom_call.1} parent=1 // pred_fallthru
      _
    // Predicated region
    $region30: #{tpu_custom_call.1} parent=1 // pred_check
      _
    $region31: #{tpu_custom_call.1} parent=1 // pred_check_branch
      %43 = sbr.rel (0) target = $region33
    $region32: #{tpu_custom_call.1} parent=1 // pred_region
      %44 = dma.done [#allocation3], 16384
    $region33: #{tpu_custom_call.1} parent=1 // pred_fallthru
      _
    %v46 = vld [vmem:[%s0] sm:$0x1]
    %v47 = vpack.c.bf16 %v46, %v46
    %v48 = vld [vmem:[%s1] sm:$0xff]
    %v49 = vld [vmem:[%s1 + $0x10] sm:$0xff]
    %v50 = vld [vmem:[%s1 + $0x18] sm:$0xff]
    %v51 = vld [vmem:[%s1 + $0x20] sm:$0xff]
    %v52 = vld [vmem:[%s1 + $0x30] sm:$0xff]
    %v53 = vld [vmem:[%s1 + $0x38] sm:$0xff]
    %v54 = vld [vmem:[%s1 + $0x40] sm:$0xff]
    %v55 = vld [vmem:[%s1 + $0x50] sm:$0xff]
    %v56 = vld [vmem:[%s1 + $0x58] sm:$0xff]
    %v57 = vld [vmem:[%s1 + $0x60] sm:$0x77]
    %v58 = vld [vmem:[%s1 + $0x70] sm:$0x77]
    %v59 = vld [vmem:[%s1 + $0x78] sm:$0x77]
    %v60 = vld [vmem:[%s2] sm:$0xff]
    %v73 = vunpack.c.l.b16 %v48
    %v74 = vunpack.c.h.b16 %v48
    %v75 = vunpack.c.l.b16 %v49
    %v76 = vunpack.c.h.b16 %v49
    %v77 = vunpack.c.l.b16 %v50
    %v78 = vunpack.c.h.b16 %v50
    %v79 = vunpack.c.l.b16 %v51
    %v80 = vunpack.c.h.b16 %v51
    %v81 = vunpack.c.l.b16 %v52
    %v82 = vunpack.c.h.b16 %v52
    %v83 = vunpack.c.l.b16 %v53
    %v84 = vunpack.c.h.b16 %v53
    %v85 = vunpack.c.l.b16 %v54
    %v86 = vunpack.c.h.b16 %v54
    %v87 = vunpack.c.l.b16 %v55
    %v88 = vunpack.c.h.b16 %v55
    %v89 = vunpack.c.l.b16 %v56
    %v90 = vunpack.c.h.b16 %v56
    %v91 = vunpack.c.l.b16 %v57
    %v92 = vunpack.c.h.b16 %v57
    %v93 = vunpack.c.l.b16 %v58
    %v94 = vunpack.c.h.b16 %v58
    %v95 = vunpack.c.l.b16 %v59
    %v96 = vunpack.c.h.b16 %v59
    %v97 = vpack.c.b16 %v79, %v73
    %v98 = vpack.c.b16 %v80, %v74
    %v99 = vpack.c.b16 %v81, %v75
    %v100 = vpack.c.b16 %v82, %v76
    %v101 = vpack.c.b16 %v83, %v77
    %v102 = vpack.c.b16 %v84, %v78
    %v103 = vpack.c.b16 %v91, %v85
    %v104 = vpack.c.b16 %v92, %v86
    %v105 = vpack.c.b16 %v93, %v87
    %v106 = vpack.c.b16 %v94, %v88
    %v107 = vpack.c.b16 %v95, %v89
    %v108 = vpack.c.b16 %v96, %v90
    %v116 = vlaneseq
    %v117 = vshrl.u32 %v116, 7
    %v118 = vsub.s32 0, %v117
    %v119 = vrot.slane %v60, %v118
    %v120 = vlaneseq
    %v121 = vshrl.u32 %v120, 7
    %v122 = vsub.s32 1, %v121
    %v123 = vrot.slane %v60, %v122
    %v124 = vlaneseq
    %v125 = vshrl.u32 %v124, 7
    %v126 = vsub.s32 4, %v125
    %v127 = vrot.slane %v60, %v126
    %v128 = vlaneseq
    %v129 = vshrl.u32 %v128, 7
    %v130 = vsub.s32 5, %v129
    %v131 = vrot.slane %v60, %v130
    %v132 = vlaneseq
    %v133 = vshrl.u32 %v132, 7
    %v134 = vsub.s32 6, %v133
    %v135 = vrot.slane %v60, %v134
    %v136 = vlaneseq
    %v137 = vshrl.u32 %v136, 7
    %v138 = vsub.s32 7, %v137
    %v139 = vrot.slane %v60, %v138
    %vm146 = vcmask 244736
    %v148 = vsel %vm146, %v47, 0
    %vm150 = vcmask 1046528
    %v152 = vsel %vm150, %v103, 0
    %v155 = vsel %vm150, %v104, 0
    %v158 = vsel %vm150, %v105, 0
    %v161 = vsel %vm150, %v106, 0
    %v164 = vsel %vm150, %v107, 0
    %v167 = vsel %vm150, %v108, 0
    %169 = vmatprep.subr.bf16.mxu0 %v98
    %170 = vmatpush1.bf16.msra.mxu0 %v97
    %171 = vmatprep.subr.bf16.mxu0 %v155
    %172 = vmatpush1.bf16.msra.mxu0 %v152
    %173 = vmatprep.subr.bf16.mxu0 0
    %174 = vmatpush1.bf16.msra.mxu0 0
    %175 = vmatprep.subr.bf16.mxu0 0
    %176 = vmatpush1.bf16.msra.mxu0 0
    %177 = vmatprep.subr.bf16.mxu0 0
    %178 = vmatpush1.bf16.msra.mxu0 0
    %179 = vmatprep.subr.bf16.mxu0 0
    %180 = vmatpush1.bf16.msra.mxu0 0
    %181 = vmatprep.subr.bf16.mxu0 0
    %182 = vmatpush1.bf16.msra.mxu0 0
    %183 = vmatprep.subr.bf16.mxu0 0
    %184 = vmatpush1.bf16.msra.mxu0 0
    %185 = vmatprep.subr.bf16.mxu0 0
    %186 = vmatpush1.bf16.msra.mxu0 0
    %187 = vmatprep.subr.bf16.mxu0 0
    %188 = vmatpush1.bf16.msra.mxu0 0
    %189 = vmatprep.subr.bf16.mxu0 0
    %190 = vmatpush1.bf16.msra.mxu0 0
    %191 = vmatprep.subr.bf16.mxu0 0
    %192 = vmatpush1.bf16.msra.mxu0 0
    %193 = vmatprep.subr.bf16.mxu0 0
    %194 = vmatpush1.bf16.msra.mxu0 0
    %195 = vmatprep.subr.bf16.mxu0 0
    %196 = vmatpush1.bf16.msra.mxu0 0
    %197 = vmatprep.subr.bf16.mxu0 0
    %198 = vmatpush1.bf16.msra.mxu0 0
    %199 = vmatprep.subr.bf16.mxu0 0
    %200 = vmatpush1.bf16.msra.mxu0 0
    %201 = vmatprep.mubr.bf16.mxu0 0
    %202 = vmatmul.mubr.bf16.gmra.mrb[0].mxu0 %v148
    %v203 = vpop.f32.mrb[0].mxu0
    %v204 = vadd.f32 %v119, %v203
    %v205 = vpop.f32.mrb[0].mxu0
    %v206 = vadd.f32 %v123, %v205
    %v207 = vpop.f32.mrb[0].mxu0
    %v208 = vpop.f32.mrb[0].mxu0
    %209 = vdwg.mxu0
    %210 = vmatprep.subr.bf16.mxu0 %v100
    %211 = vmatpush1.bf16.msra.mxu0 %v99
    %212 = vmatprep.subr.bf16.mxu0 %v161
    %213 = vmatpush1.bf16.msra.mxu0 %v158
    %214 = vmatprep.subr.bf16.mxu0 0
    %215 = vmatpush1.bf16.msra.mxu0 0
    %216 = vmatprep.subr.bf16.mxu0 0
    %217 = vmatpush1.bf16.msra.mxu0 0
    %218 = vmatprep.subr.bf16.mxu0 0
    %219 = vmatpush1.bf16.msra.mxu0 0
    %220 = vmatprep.subr.bf16.mxu0 0
    %221 = vmatpush1.bf16.msra.mxu0 0
    %222 = vmatprep.subr.bf16.mxu0 0
    %223 = vmatpush1.bf16.msra.mxu0 0
    %224 = vmatprep.subr.bf16.mxu0 0
    %225 = vmatpush1.bf16.msra.mxu0 0
    %226 = vmatprep.subr.bf16.mxu0 0
    %227 = vmatpush1.bf16.msra.mxu0 0
    %228 = vmatprep.subr.bf16.mxu0 0
    %229 = vmatpush1.bf16.msra.mxu0 0
    %230 = vmatprep.subr.bf16.mxu0 0
    %231 = vmatpush1.bf16.msra.mxu0 0
    %232 = vmatprep.subr.bf16.mxu0 0
    %233 = vmatpush1.bf16.msra.mxu0 0
    %234 = vmatprep.subr.bf16.mxu0 0
    %235 = vmatpush1.bf16.msra.mxu0 0
    %236 = vmatprep.subr.bf16.mxu0 0
    %237 = vmatpush1.bf16.msra.mxu0 0
    %238 = vmatprep.subr.bf16.mxu0 0
    %239 = vmatpush1.bf16.msra.mxu0 0
    %240 = vmatprep.subr.bf16.mxu0 0
    %241 = vmatpush1.bf16.msra.mxu0 0
    %242 = vmatprep.mubr.bf16.mxu0 0
    %243 = vmatmul.mubr.bf16.gmra.mrb[0].mxu0 %v148
    %v244 = vpop.f32.mrb[0].mxu0
    %v245 = vadd.f32 %v127, %v244
    %v246 = vpop.f32.mrb[0].mxu0
    %v247 = vadd.f32 %v131, %v246
    %v248 = vpop.f32.mrb[0].mxu0
    %v249 = vpop.f32.mrb[0].mxu0
    %250 = vdwg.mxu0
    %251 = vmatprep.subr.bf16.mxu0 %v102
    %252 = vmatpush1.bf16.msra.mxu0 %v101
    %253 = vmatprep.subr.bf16.mxu0 %v167
    %254 = vmatpush1.bf16.msra.mxu0 %v164
    %255 = vmatprep.subr.bf16.mxu0 0
    %256 = vmatpush1.bf16.msra.mxu0 0
    %257 = vmatprep.subr.bf16.mxu0 0
    %258 = vmatpush1.bf16.msra.mxu0 0
    %259 = vmatprep.subr.bf16.mxu0 0
    %260 = vmatpush1.bf16.msra.mxu0 0
    %261 = vmatprep.subr.bf16.mxu0 0
    %262 = vmatpush1.bf16.msra.mxu0 0
    %263 = vmatprep.subr.bf16.mxu0 0
    %264 = vmatpush1.bf16.msra.mxu0 0
    %265 = vmatprep.subr.bf16.mxu0 0
    %266 = vmatpush1.bf16.msra.mxu0 0
    %267 = vmatprep.subr.bf16.mxu0 0
    %268 = vmatpush1.bf16.msra.mxu0 0
    %269 = vmatprep.subr.bf16.mxu0 0
    %270 = vmatpush1.bf16.msra.mxu0 0
    %271 = vmatprep.subr.bf16.mxu0 0
    %272 = vmatpush1.bf16.msra.mxu0 0
    %273 = vmatprep.subr.bf16.mxu0 0
    %274 = vmatpush1.bf16.msra.mxu0 0
    %275 = vmatprep.subr.bf16.mxu0 0
    %276 = vmatpush1.bf16.msra.mxu0 0
    %277 = vmatprep.subr.bf16.mxu0 0
    %278 = vmatpush1.bf16.msra.mxu0 0
    %279 = vmatprep.subr.bf16.mxu0 0
    %280 = vmatpush1.bf16.msra.mxu0 0
    %281 = vmatprep.subr.bf16.mxu0 0
    %282 = vmatpush1.bf16.msra.mxu0 0
    %283 = vmatprep.mubr.bf16.mxu0 0
    %284 = vmatmul.mubr.bf16.gmra.mrb[0].mxu0 %v148
    %v285 = vpop.f32.mrb[0].mxu0
    %v286 = vadd.f32 %v135, %v285
    %v287 = vpop.f32.mrb[0].mxu0
    %v288 = vadd.f32 %v139, %v287
    %v289 = vpop.f32.mrb[0].mxu0
    %v290 = vpop.f32.mrb[0].mxu0
    %291 = vdwg.mxu0
    %v292 = vxor.u32 %v204, 2147483648
    %v293 = vxor.u32 %v206, 2147483648
    %v294 = vmul.f32 %v292, 1.442695
    %v295 = vpow.pop %v294
    %v296 = vmul.f32 %v293, 1.442695
    %v297 = vpow.pop %v296
    %v298 = vadd.f32 %v295, 1.0
    %v299 = vadd.f32 %v297, 1.0
    %v300 = vrcp.pop %v298
    %v301 = vmul.f32 1.0, %v300
    %v302 = vrcp.pop %v299
    %v303 = vmul.f32 1.0, %v302
    %v304 = vtanh.pop %v245
    %v305 = vtanh.pop %v247
    %v306 = vxor.u32 %v286, 2147483648
    %v307 = vxor.u32 %v288, 2147483648
    %v308 = vmul.f32 %v306, 1.442695
    %v309 = vpow.pop %v308
    %v310 = vmul.f32 %v307, 1.442695
    %v311 = vpow.pop %v310
    %v312 = vadd.f32 %v309, 1.0
    %v313 = vadd.f32 %v311, 1.0
    %v314 = vrcp.pop %v312
    %v315 = vmul.f32 1.0, %v314
    %v316 = vrcp.pop %v313
    %v317 = vmul.f32 1.0, %v316
    %v318 = vmul.f32 %v301, %v304
    %v319 = vmul.f32 %v303, %v305
    %v320 = vtanh.pop %v318
    %v321 = vtanh.pop %v319
    %v322 = vmul.f32 %v315, %v320
    %v323 = vmul.f32 %v317, %v321
    %v324 = vpack.c.bf16 %v322, %v322
    %v325 = vpack.c.bf16 %v323, %v323
    %v326 = vld [vmem:[#allocation2] sm:$0xff]
    %v327 = vld [vmem:[#allocation2 + $0x10] sm:$0xff]
    %v328 = vld [vmem:[#allocation2 + $0x18] sm:$0xff]
    %v329 = vld [vmem:[#allocation2 + $0x20] sm:$0xff]
    %v330 = vld [vmem:[#allocation2 + $0x30] sm:$0xff]
    %v331 = vld [vmem:[#allocation2 + $0x38] sm:$0xff]
    %v332 = vld [vmem:[#allocation2 + $0x40] sm:$0xff]
    %v333 = vld [vmem:[#allocation2 + $0x50] sm:$0xff]
    %v334 = vld [vmem:[#allocation2 + $0x58] sm:$0xff]
    %v335 = vld [vmem:[#allocation2 + $0x60] sm:$0xff]
    %v336 = vld [vmem:[#allocation2 + $0x70] sm:$0xff]
    %v337 = vld [vmem:[#allocation2 + $0x78] sm:$0xff]
    %v338 = vld [vmem:[#allocation2 + $0x80] sm:$0xff]
    %v339 = vld [vmem:[#allocation2 + $0x90] sm:$0xff]
    %v340 = vld [vmem:[#allocation2 + $0x98] sm:$0xff]
    %v341 = vld [vmem:[#allocation2 + $0xa0] sm:$0xff]
    %v342 = vld [vmem:[#allocation2 + $0xb0] sm:$0xff]
    %v343 = vld [vmem:[#allocation2 + $0xb8] sm:$0xff]
    %v344 = vld [vmem:[#allocation2 + $0xc0] sm:$0xff]
    %v345 = vld [vmem:[#allocation2 + $0xd0] sm:$0xff]
    %v346 = vld [vmem:[#allocation2 + $0xd8] sm:$0xff]
    %v347 = vld [vmem:[#allocation2 + $0xe0] sm:$0xff]
    %v348 = vld [vmem:[#allocation2 + $0xf0] sm:$0xff]
    %v349 = vld [vmem:[#allocation2 + $0xf8] sm:$0xff]
    %v350 = vld [vmem:[#allocation2 + $0x100] sm:$0xff]
    %v351 = vld [vmem:[#allocation2 + $0x110] sm:$0xff]
    %v352 = vld [vmem:[#allocation2 + $0x118] sm:$0xff]
    %v353 = vld [vmem:[#allocation2 + $0x120] sm:$0xff]
    %v354 = vld [vmem:[#allocation2 + $0x130] sm:$0xff]
    %v355 = vld [vmem:[#allocation2 + $0x138] sm:$0xff]
    %v356 = vld [vmem:[#allocation2 + $0x140] sm:$0xff]
    %v357 = vld [vmem:[#allocation2 + $0x150] sm:$0xff]
    %v358 = vld [vmem:[#allocation2 + $0x158] sm:$0xff]
    %v359 = vld [vmem:[#allocation2 + $0x160] sm:$0xff]
    %v360 = vld [vmem:[#allocation2 + $0x170] sm:$0xff]
    %v361 = vld [vmem:[#allocation2 + $0x178] sm:$0xff]
    %v362 = vld [vmem:[#allocation2 + $0x180] sm:$0xff]
    %v363 = vld [vmem:[#allocation2 + $0x190] sm:$0xff]
    %v364 = vld [vmem:[#allocation2 + $0x198] sm:$0xff]
    %v365 = vld [vmem:[#allocation2 + $0x1a0] sm:$0xff]
    %v366 = vld [vmem:[#allocation2 + $0x1b0] sm:$0xff]
    %v367 = vld [vmem:[#allocation2 + $0x1b8] sm:$0xff]
    %v368 = vld [vmem:[#allocation2 + $0x1c0] sm:$0xff]
    %v369 = vld [vmem:[#allocation2 + $0x1d0] sm:$0xff]
    %v370 = vld [vmem:[#allocation2 + $0x1d8] sm:$0xff]
    %v371 = vld [vmem:[#allocation2 + $0x1e0] sm:$0xff]
    %v372 = vld [vmem:[#allocation2 + $0x1f0] sm:$0xff]
    %v373 = vld [vmem:[#allocation2 + $0x1f8] sm:$0xff]
    %v374 = vld [vmem:[#allocation2 + $0x200] sm:$0xff]
    %v375 = vld [vmem:[#allocation2 + $0x210] sm:$0xff]
    %v376 = vld [vmem:[#allocation2 + $0x218] sm:$0xff]
    %v377 = vld [vmem:[#allocation2 + $0x220] sm:$0xff]
    %v378 = vld [vmem:[#allocation2 + $0x230] sm:$0xff]
    %v379 = vld [vmem:[#allocation2 + $0x238] sm:$0xff]
    %v380 = vld [vmem:[#allocation2 + $0x240] sm:$0xff]
    %v381 = vld [vmem:[#allocation2 + $0x250] sm:$0xff]
    %v382 = vld [vmem:[#allocation2 + $0x258] sm:$0xff]
    %v383 = vld [vmem:[#allocation2 + $0x260] sm:$0xff]
    %v384 = vld [vmem:[#allocation2 + $0x270] sm:$0xff]
    %v385 = vld [vmem:[#allocation2 + $0x278] sm:$0xff]
    %v386 = vld [vmem:[#allocation2 + $0x280] sm:$0xff]
    %v387 = vld [vmem:[#allocation2 + $0x290] sm:$0xff]
    %v388 = vld [vmem:[#allocation2 + $0x298] sm:$0xff]
    %v389 = vld [vmem:[#allocation2 + $0x2a0] sm:$0xff]
    %v390 = vld [vmem:[#allocation2 + $0x2b0] sm:$0xff]
    %v391 = vld [vmem:[#allocation2 + $0x2b8] sm:$0xff]
    %v392 = vld [vmem:[#allocation2 + $0x2c0] sm:$0xff]
    %v393 = vld [vmem:[#allocation2 + $0x2d0] sm:$0xff]
    %v394 = vld [vmem:[#allocation2 + $0x2d8] sm:$0xff]
    %v395 = vld [vmem:[#allocation2 + $0x2e0] sm:$0xff]
    %v396 = vld [vmem:[#allocation2 + $0x2f0] sm:$0xff]
    %v397 = vld [vmem:[#allocation2 + $0x2f8] sm:$0xff]
    %v398 = vld [vmem:[#allocation2 + $0x300] sm:$0xff]
    %v399 = vld [vmem:[#allocation2 + $0x310] sm:$0xff]
    %v400 = vld [vmem:[#allocation2 + $0x318] sm:$0xff]
    %v401 = vld [vmem:[#allocation2 + $0x320] sm:$0xff]
    %v402 = vld [vmem:[#allocation2 + $0x330] sm:$0xff]
    %v403 = vld [vmem:[#allocation2 + $0x338] sm:$0xff]
    %v404 = vld [vmem:[#allocation2 + $0x340] sm:$0xff]
    %v405 = vld [vmem:[#allocation2 + $0x350] sm:$0xff]
    %v406 = vld [vmem:[#allocation2 + $0x358] sm:$0xff]
    %v407 = vld [vmem:[#allocation2 + $0x360] sm:$0xff]
    %v408 = vld [vmem:[#allocation2 + $0x370] sm:$0xff]
    %v409 = vld [vmem:[#allocation2 + $0x378] sm:$0xff]
    %v410 = vld [vmem:[#allocation2 + $0x380] sm:$0xff]
    %v411 = vld [vmem:[#allocation2 + $0x390] sm:$0xff]
    %v412 = vld [vmem:[#allocation2 + $0x398] sm:$0xff]
    %v413 = vld [vmem:[#allocation2 + $0x3a0] sm:$0xff]
    %v414 = vld [vmem:[#allocation2 + $0x3b0] sm:$0xff]
    %v415 = vld [vmem:[#allocation2 + $0x3b8] sm:$0xff]
    %v416 = vld [vmem:[#allocation2 + $0x3c0] sm:$0xff]
    %v417 = vld [vmem:[#allocation2 + $0x3d0] sm:$0xff]
    %v418 = vld [vmem:[#allocation2 + $0x3d8] sm:$0xff]
    %v419 = vld [vmem:[#allocation2 + $0x3e0] sm:$0xff]
    %v420 = vld [vmem:[#allocation2 + $0x3f0] sm:$0xff]
    %v421 = vld [vmem:[#allocation2 + $0x3f8] sm:$0xff]
    %v422 = vld [vmem:[%s4] sm:$0xff]
    %v519 = vunpack.c.l.b16 %v326
    %v520 = vunpack.c.h.b16 %v326
    %v521 = vunpack.c.l.b16 %v327
    %v522 = vunpack.c.h.b16 %v327
    %v523 = vunpack.c.l.b16 %v328
    %v524 = vunpack.c.h.b16 %v328
    %v525 = vunpack.c.l.b16 %v329
    %v526 = vunpack.c.h.b16 %v329
    %v527 = vunpack.c.l.b16 %v330
    %v528 = vunpack.c.h.b16 %v330
    %v529 = vunpack.c.l.b16 %v331
    %v530 = vunpack.c.h.b16 %v331
    %v531 = vunpack.c.l.b16 %v332
    %v532 = vunpack.c.h.b16 %v332
    %v533 = vunpack.c.l.b16 %v333
    %v534 = vunpack.c.h.b16 %v333
    %v535 = vunpack.c.l.b16 %v334
    %v536 = vunpack.c.h.b16 %v334
    %v537 = vunpack.c.l.b16 %v335
    %v538 = vunpack.c.h.b16 %v335
    %v539 = vunpack.c.l.b16 %v336
    %v540 = vunpack.c.h.b16 %v336
    %v541 = vunpack.c.l.b16 %v337
    %v542 = vunpack.c.h.b16 %v337
    %v543 = vunpack.c.l.b16 %v338
    %v544 = vunpack.c.h.b16 %v338
    %v545 = vunpack.c.l.b16 %v339
    %v546 = vunpack.c.h.b16 %v339
    %v547 = vunpack.c.l.b16 %v340
    %v548 = vunpack.c.h.b16 %v340
    %v549 = vunpack.c.l.b16 %v341
    %v550 = vunpack.c.h.b16 %v341
    %v551 = vunpack.c.l.b16 %v342
    %v552 = vunpack.c.h.b16 %v342
    %v553 = vunpack.c.l.b16 %v343
    %v554 = vunpack.c.h.b16 %v343
    %v555 = vunpack.c.l.b16 %v344
    %v556 = vunpack.c.h.b16 %v344
    %v557 = vunpack.c.l.b16 %v345
    %v558 = vunpack.c.h.b16 %v345
    %v559 = vunpack.c.l.b16 %v346
    %v560 = vunpack.c.h.b16 %v346
    %v561 = vunpack.c.l.b16 %v347
    %v562 = vunpack.c.h.b16 %v347
    %v563 = vunpack.c.l.b16 %v348
    %v564 = vunpack.c.h.b16 %v348
    %v565 = vunpack.c.l.b16 %v349
    %v566 = vunpack.c.h.b16 %v349
    %v567 = vunpack.c.l.b16 %v350
    %v568 = vunpack.c.h.b16 %v350
    %v569 = vunpack.c.l.b16 %v351
    %v570 = vunpack.c.h.b16 %v351
    %v571 = vunpack.c.l.b16 %v352
    %v572 = vunpack.c.h.b16 %v352
    %v573 = vunpack.c.l.b16 %v353
    %v574 = vunpack.c.h.b16 %v353
    %v575 = vunpack.c.l.b16 %v354
    %v576 = vunpack.c.h.b16 %v354
    %v577 = vunpack.c.l.b16 %v355
    %v578 = vunpack.c.h.b16 %v355
    %v579 = vunpack.c.l.b16 %v356
    %v580 = vunpack.c.h.b16 %v356
    %v581 = vunpack.c.l.b16 %v357
    %v582 = vunpack.c.h.b16 %v357
    %v583 = vunpack.c.l.b16 %v358
    %v584 = vunpack.c.h.b16 %v358
    %v585 = vunpack.c.l.b16 %v359
    %v586 = vunpack.c.h.b16 %v359
    %v587 = vunpack.c.l.b16 %v360
    %v588 = vunpack.c.h.b16 %v360
    %v589 = vunpack.c.l.b16 %v361
    %v590 = vunpack.c.h.b16 %v361
    %v591 = vunpack.c.l.b16 %v362
    %v592 = vunpack.c.h.b16 %v362
    %v593 = vunpack.c.l.b16 %v363
    %v594 = vunpack.c.h.b16 %v363
    %v595 = vunpack.c.l.b16 %v364
    %v596 = vunpack.c.h.b16 %v364
    %v597 = vunpack.c.l.b16 %v365
    %v598 = vunpack.c.h.b16 %v365
    %v599 = vunpack.c.l.b16 %v366
    %v600 = vunpack.c.h.b16 %v366
    %v601 = vunpack.c.l.b16 %v367
    %v602 = vunpack.c.h.b16 %v367
    %v603 = vunpack.c.l.b16 %v368
    %v604 = vunpack.c.h.b16 %v368
    %v605 = vunpack.c.l.b16 %v369
    %v606 = vunpack.c.h.b16 %v369
    %v607 = vunpack.c.l.b16 %v370
    %v608 = vunpack.c.h.b16 %v370
    %v609 = vunpack.c.l.b16 %v371
    %v610 = vunpack.c.h.b16 %v371
    %v611 = vunpack.c.l.b16 %v372
    %v612 = vunpack.c.h.b16 %v372
    %v613 = vunpack.c.l.b16 %v373
    %v614 = vunpack.c.h.b16 %v373
    %v615 = vunpack.c.l.b16 %v374
    %v616 = vunpack.c.h.b16 %v374
    %v617 = vunpack.c.l.b16 %v375
    %v618 = vunpack.c.h.b16 %v375
    %v619 = vunpack.c.l.b16 %v376
    %v620 = vunpack.c.h.b16 %v376
    %v621 = vunpack.c.l.b16 %v377
    %v622 = vunpack.c.h.b16 %v377
    %v623 = vunpack.c.l.b16 %v378
    %v624 = vunpack.c.h.b16 %v378
    %v625 = vunpack.c.l.b16 %v379
    %v626 = vunpack.c.h.b16 %v379
    %v627 = vunpack.c.l.b16 %v380
    %v628 = vunpack.c.h.b16 %v380
    %v629 = vunpack.c.l.b16 %v381
    %v630 = vunpack.c.h.b16 %v381
    %v631 = vunpack.c.l.b16 %v382
    %v632 = vunpack.c.h.b16 %v382
    %v633 = vunpack.c.l.b16 %v383
    %v634 = vunpack.c.h.b16 %v383
    %v635 = vunpack.c.l.b16 %v384
    %v636 = vunpack.c.h.b16 %v384
    %v637 = vunpack.c.l.b16 %v385
    %v638 = vunpack.c.h.b16 %v385
    %v639 = vunpack.c.l.b16 %v386
    %v640 = vunpack.c.h.b16 %v386
    %v641 = vunpack.c.l.b16 %v387
    %v642 = vunpack.c.h.b16 %v387
    %v643 = vunpack.c.l.b16 %v388
    %v644 = vunpack.c.h.b16 %v388
    %v645 = vunpack.c.l.b16 %v389
    %v646 = vunpack.c.h.b16 %v389
    %v647 = vunpack.c.l.b16 %v390
    %v648 = vunpack.c.h.b16 %v390
    %v649 = vunpack.c.l.b16 %v391
    %v650 = vunpack.c.h.b16 %v391
    %v651 = vunpack.c.l.b16 %v392
    %v652 = vunpack.c.h.b16 %v392
    %v653 = vunpack.c.l.b16 %v393
    %v654 = vunpack.c.h.b16 %v393
    %v655 = vunpack.c.l.b16 %v394
    %v656 = vunpack.c.h.b16 %v394
    %v657 = vunpack.c.l.b16 %v395
    %v658 = vunpack.c.h.b16 %v395
    %v659 = vunpack.c.l.b16 %v396
    %v660 = vunpack.c.h.b16 %v396
    %v661 = vunpack.c.l.b16 %v397
    %v662 = vunpack.c.h.b16 %v397
    %v663 = vunpack.c.l.b16 %v398
    %v664 = vunpack.c.h.b16 %v398
    %v665 = vunpack.c.l.b16 %v399
    %v666 = vunpack.c.h.b16 %v399
    %v667 = vunpack.c.l.b16 %v400
    %v668 = vunpack.c.h.b16 %v400
    %v669 = vunpack.c.l.b16 %v401
    %v670 = vunpack.c.h.b16 %v401
    %v671 = vunpack.c.l.b16 %v402
    %v672 = vunpack.c.h.b16 %v402
    %v673 = vunpack.c.l.b16 %v403
    %v674 = vunpack.c.h.b16 %v403
    %v675 = vunpack.c.l.b16 %v404
    %v676 = vunpack.c.h.b16 %v404
    %v677 = vunpack.c.l.b16 %v405
    %v678 = vunpack.c.h.b16 %v405
    %v679 = vunpack.c.l.b16 %v406
    %v680 = vunpack.c.h.b16 %v406
    %v681 = vunpack.c.l.b16 %v407
    %v682 = vunpack.c.h.b16 %v407
    %v683 = vunpack.c.l.b16 %v408
    %v684 = vunpack.c.h.b16 %v408
    %v685 = vunpack.c.l.b16 %v409
    %v686 = vunpack.c.h.b16 %v409
    %v687 = vunpack.c.l.b16 %v410
    %v688 = vunpack.c.h.b16 %v410
    %v689 = vunpack.c.l.b16 %v411
    %v690 = vunpack.c.h.b16 %v411
    %v691 = vunpack.c.l.b16 %v412
    %v692 = vunpack.c.h.b16 %v412
    %v693 = vunpack.c.l.b16 %v413
    %v694 = vunpack.c.h.b16 %v413
    %v695 = vunpack.c.l.b16 %v414
    %v696 = vunpack.c.h.b16 %v414
    %v697 = vunpack.c.l.b16 %v415
    %v698 = vunpack.c.h.b16 %v415
    %v699 = vunpack.c.l.b16 %v416
    %v700 = vunpack.c.h.b16 %v416
    %v701 = vunpack.c.l.b16 %v417
    %v702 = vunpack.c.h.b16 %v417
    %v703 = vunpack.c.l.b16 %v418
    %v704 = vunpack.c.h.b16 %v418
    %v705 = vunpack.c.l.b16 %v419
    %v706 = vunpack.c.h.b16 %v419
    %v707 = vunpack.c.l.b16 %v420
    %v708 = vunpack.c.h.b16 %v420
    %v709 = vunpack.c.l.b16 %v421
    %v710 = vunpack.c.h.b16 %v421
    %v711 = vpack.c.b16 %v525, %v519
    %v712 = vpack.c.b16 %v526, %v520
    %v713 = vpack.c.b16 %v527, %v521
    %v714 = vpack.c.b16 %v528, %v522
    %v715 = vpack.c.b16 %v529, %v523
    %v716 = vpack.c.b16 %v530, %v524
    %v717 = vpack.c.b16 %v537, %v531
    %v718 = vpack.c.b16 %v538, %v532
    %v719 = vpack.c.b16 %v539, %v533
    %v720 = vpack.c.b16 %v540, %v534
    %v721 = vpack.c.b16 %v541, %v535
    %v722 = vpack.c.b16 %v542, %v536
    %v723 = vpack.c.b16 %v549, %v543
    %v724 = vpack.c.b16 %v550, %v544
    %v725 = vpack.c.b16 %v551, %v545
    %v726 = vpack.c.b16 %v552, %v546
    %v727 = vpack.c.b16 %v553, %v547
    %v728 = vpack.c.b16 %v554, %v548
    %v729 = vpack.c.b16 %v561, %v555
    %v730 = vpack.c.b16 %v562, %v556
    %v731 = vpack.c.b16 %v563, %v557
    %v732 = vpack.c.b16 %v564, %v558
    %v733 = vpack.c.b16 %v565, %v559
    %v734 = vpack.c.b16 %v566, %v560
    %v735 = vpack.c.b16 %v573, %v567
    %v736 = vpack.c.b16 %v574, %v568
    %v737 = vpack.c.b16 %v575, %v569
    %v738 = vpack.c.b16 %v576, %v570
    %v739 = vpack.c.b16 %v577, %v571
    %v740 = vpack.c.b16 %v578, %v572
    %v741 = vpack.c.b16 %v585, %v579
    %v742 = vpack.c.b16 %v586, %v580
    %v743 = vpack.c.b16 %v587, %v581
    %v744 = vpack.c.b16 %v588, %v582
    %v745 = vpack.c.b16 %v589, %v583
    %v746 = vpack.c.b16 %v590, %v584
    %v747 = vpack.c.b16 %v597, %v591
    %v748 = vpack.c.b16 %v598, %v592
    %v749 = vpack.c.b16 %v599, %v593
    %v750 = vpack.c.b16 %v600, %v594
    %v751 = vpack.c.b16 %v601, %v595
    %v752 = vpack.c.b16 %v602, %v596
    %v753 = vpack.c.b16 %v609, %v603
    %v754 = vpack.c.b16 %v610, %v604
    %v755 = vpack.c.b16 %v611, %v605
    %v756 = vpack.c.b16 %v612, %v606
    %v757 = vpack.c.b16 %v613, %v607
    %v758 = vpack.c.b16 %v614, %v608
    %v759 = vpack.c.b16 %v621, %v615
    %v760 = vpack.c.b16 %v622, %v616
    %v761 = vpack.c.b16 %v623, %v617
    %v762 = vpack.c.b16 %v624, %v618
    %v763 = vpack.c.b16 %v625, %v619
    %v764 = vpack.c.b16 %v626, %v620
    %v765 = vpack.c.b16 %v633, %v627
    %v766 = vpack.c.b16 %v634, %v628
    %v767 = vpack.c.b16 %v635, %v629
    %v768 = vpack.c.b16 %v636, %v630
    %v769 = vpack.c.b16 %v637, %v631
    %v770 = vpack.c.b16 %v638, %v632
    %v771 = vpack.c.b16 %v645, %v639
    %v772 = vpack.c.b16 %v646, %v640
    %v773 = vpack.c.b16 %v647, %v641
    %v774 = vpack.c.b16 %v648, %v642
    %v775 = vpack.c.b16 %v649, %v643
    %v776 = vpack.c.b16 %v650, %v644
    %v777 = vpack.c.b16 %v657, %v651
    %v778 = vpack.c.b16 %v658, %v652
    %v779 = vpack.c.b16 %v659, %v653
    %v780 = vpack.c.b16 %v660, %v654
    %v781 = vpack.c.b16 %v661, %v655
    %v782 = vpack.c.b16 %v662, %v656
    %v783 = vpack.c.b16 %v669, %v663
    %v784 = vpack.c.b16 %v670, %v664
    %v785 = vpack.c.b16 %v671, %v665
    %v786 = vpack.c.b16 %v672, %v666
    %v787 = vpack.c.b16 %v673, %v667
    %v788 = vpack.c.b16 %v674, %v668
    %v789 = vpack.c.b16 %v681, %v675
    %v790 = vpack.c.b16 %v682, %v676
    %v791 = vpack.c.b16 %v683, %v677
    %v792 = vpack.c.b16 %v684, %v678
    %v793 = vpack.c.b16 %v685, %v679
    %v794 = vpack.c.b16 %v686, %v680
    %v795 = vpack.c.b16 %v693, %v687
    %v796 = vpack.c.b16 %v694, %v688
    %v797 = vpack.c.b16 %v695, %v689
    %v798 = vpack.c.b16 %v696, %v690
    %v799 = vpack.c.b16 %v697, %v691
    %v800 = vpack.c.b16 %v698, %v692
    %v801 = vpack.c.b16 %v705, %v699
    %v802 = vpack.c.b16 %v706, %v700
    %v803 = vpack.c.b16 %v707, %v701
    %v804 = vpack.c.b16 %v708, %v702
    %v805 = vpack.c.b16 %v709, %v703
    %v806 = vpack.c.b16 %v710, %v704
    %v904 = vlaneseq
    %v905 = vshrl.u32 %v904, 7
    %v906 = vsub.s32 0, %v905
    %v907 = vrot.slane %v422, %v906
    %v908 = vlaneseq
    %v909 = vshrl.u32 %v908, 7
    %v910 = vsub.s32 1, %v909
    %v911 = vrot.slane %v422, %v910
    %v912 = vlaneseq
    %v913 = vshrl.u32 %v912, 7
    %v914 = vsub.s32 4, %v913
    %v915 = vrot.slane %v422, %v914
    %v916 = vlaneseq
    %v917 = vshrl.u32 %v916, 7
    %v918 = vsub.s32 5, %v917
    %v919 = vrot.slane %v422, %v918
    %v920 = vlaneseq
    %v921 = vshrl.u32 %v920, 7
    %v922 = vsub.s32 6, %v921
    %v923 = vrot.slane %v422, %v922
    %v924 = vlaneseq
    %v925 = vshrl.u32 %v924, 7
    %v926 = vsub.s32 7, %v925
    %v927 = vrot.slane %v422, %v926
    %934 = vmatprep.subr.bf16.mxu0 %v712
    %935 = vmatpush1.bf16.msra.mxu0 %v711
    %936 = vmatprep.subr.bf16.mxu0 %v718
    %937 = vmatpush1.bf16.msra.mxu0 %v717
    %938 = vmatprep.subr.bf16.mxu0 %v724
    %939 = vmatpush1.bf16.msra.mxu0 %v723
    %940 = vmatprep.subr.bf16.mxu0 %v730
    %941 = vmatpush1.bf16.msra.mxu0 %v729
    %942 = vmatprep.subr.bf16.mxu0 %v736
    %943 = vmatpush1.bf16.msra.mxu0 %v735
    %944 = vmatprep.subr.bf16.mxu0 %v742
    %945 = vmatpush1.bf16.msra.mxu0 %v741
    %946 = vmatprep.subr.bf16.mxu0 %v748
    %947 = vmatpush1.bf16.msra.mxu0 %v747
    %948 = vmatprep.subr.bf16.mxu0 %v754
    %949 = vmatpush1.bf16.msra.mxu0 %v753
    %950 = vmatprep.subr.bf16.mxu0 %v760
    %951 = vmatpush1.bf16.msra.mxu0 %v759
    %952 = vmatprep.subr.bf16.mxu0 %v766
    %953 = vmatpush1.bf16.msra.mxu0 %v765
    %954 = vmatprep.subr.bf16.mxu0 %v772
    %955 = vmatpush1.bf16.msra.mxu0 %v771
    %956 = vmatprep.subr.bf16.mxu0 %v778
    %957 = vmatpush1.bf16.msra.mxu0 %v777
    %958 = vmatprep.subr.bf16.mxu0 %v784
    %959 = vmatpush1.bf16.msra.mxu0 %v783
    %960 = vmatprep.subr.bf16.mxu0 %v790
    %961 = vmatpush1.bf16.msra.mxu0 %v789
    %962 = vmatprep.subr.bf16.mxu0 %v796
    %963 = vmatpush1.bf16.msra.mxu0 %v795
    %964 = vmatprep.subr.bf16.mxu0 %v802
    %965 = vmatpush1.bf16.msra.mxu0 %v801
    %966 = vmatprep.mubr.bf16.mxu0 %v325
    %967 = vmatmul.mubr.bf16.gmra.mrb[0].mxu0 %v324
    %v968 = vpop.f32.mrb[0].mxu0
    %v969 = vadd.f32 %v907, %v968
    %v970 = vpop.f32.mrb[0].mxu0
    %v971 = vadd.f32 %v911, %v970
    %v972 = vpop.f32.mrb[0].mxu0
    %v973 = vpop.f32.mrb[0].mxu0
    %974 = vdwg.mxu0
    %975 = vmatprep.subr.bf16.mxu0 %v714
    %976 = vmatpush1.bf16.msra.mxu0 %v713
    %977 = vmatprep.subr.bf16.mxu0 %v720
    %978 = vmatpush1.bf16.msra.mxu0 %v719
    %979 = vmatprep.subr.bf16.mxu0 %v726
    %980 = vmatpush1.bf16.msra.mxu0 %v725
    %981 = vmatprep.subr.bf16.mxu0 %v732
    %982 = vmatpush1.bf16.msra.mxu0 %v731
    %983 = vmatprep.subr.bf16.mxu0 %v738
    %984 = vmatpush1.bf16.msra.mxu0 %v737
    %985 = vmatprep.subr.bf16.mxu0 %v744
    %986 = vmatpush1.bf16.msra.mxu0 %v743
    %987 = vmatprep.subr.bf16.mxu0 %v750
    %988 = vmatpush1.bf16.msra.mxu0 %v749
    %989 = vmatprep.subr.bf16.mxu0 %v756
    %990 = vmatpush1.bf16.msra.mxu0 %v755
    %991 = vmatprep.subr.bf16.mxu0 %v762
    %992 = vmatpush1.bf16.msra.mxu0 %v761
    %993 = vmatprep.subr.bf16.mxu0 %v768
    %994 = vmatpush1.bf16.msra.mxu0 %v767
    %995 = vmatprep.subr.bf16.mxu0 %v774
    %996 = vmatpush1.bf16.msra.mxu0 %v773
    %997 = vmatprep.subr.bf16.mxu0 %v780
    %998 = vmatpush1.bf16.msra.mxu0 %v779
    %999 = vmatprep.subr.bf16.mxu0 %v786
    %1000 = vmatpush1.bf16.msra.mxu0 %v785
    %1001 = vmatprep.subr.bf16.mxu0 %v792
    %1002 = vmatpush1.bf16.msra.mxu0 %v791
    %1003 = vmatprep.subr.bf16.mxu0 %v798
    %1004 = vmatpush1.bf16.msra.mxu0 %v797
    %1005 = vmatprep.subr.bf16.mxu0 %v804
    %1006 = vmatpush1.bf16.msra.mxu0 %v803
    %1007 = vmatprep.mubr.bf16.mxu0 %v325
    %1008 = vmatmul.mubr.bf16.gmra.mrb[0].mxu0 %v324
    %v1009 = vpop.f32.mrb[0].mxu0
    %v1010 = vadd.f32 %v915, %v1009
    %v1011 = vpop.f32.mrb[0].mxu0
    %v1012 = vadd.f32 %v919, %v1011
    %v1013 = vpop.f32.mrb[0].mxu0
    %v1014 = vpop.f32.mrb[0].mxu0
    %1015 = vdwg.mxu0
    %1016 = vmatprep.subr.bf16.mxu0 %v716
    %1017 = vmatpush1.bf16.msra.mxu0 %v715
    %1018 = vmatprep.subr.bf16.mxu0 %v722
    %1019 = vmatpush1.bf16.msra.mxu0 %v721
    %1020 = vmatprep.subr.bf16.mxu0 %v728
    %1021 = vmatpush1.bf16.msra.mxu0 %v727
    %1022 = vmatprep.subr.bf16.mxu0 %v734
    %1023 = vmatpush1.bf16.msra.mxu0 %v733
    %1024 = vmatprep.subr.bf16.mxu0 %v740
    %1025 = vmatpush1.bf16.msra.mxu0 %v739
    %1026 = vmatprep.subr.bf16.mxu0 %v746
    %1027 = vmatpush1.bf16.msra.mxu0 %v745
    %1028 = vmatprep.subr.bf16.mxu0 %v752
    %1029 = vmatpush1.bf16.msra.mxu0 %v751
    %1030 = vmatprep.subr.bf16.mxu0 %v758
    %1031 = vmatpush1.bf16.msra.mxu0 %v757
    %1032 = vmatprep.subr.bf16.mxu0 %v764
    %1033 = vmatpush1.bf16.msra.mxu0 %v763
    %1034 = vmatprep.subr.bf16.mxu0 %v770
    %1035 = vmatpush1.bf16.msra.mxu0 %v769
    %1036 = vmatprep.subr.bf16.mxu0 %v776
    %1037 = vmatpush1.bf16.msra.mxu0 %v775
    %1038 = vmatprep.subr.bf16.mxu0 %v782
    %1039 = vmatpush1.bf16.msra.mxu0 %v781
    %1040 = vmatprep.subr.bf16.mxu0 %v788
    %1041 = vmatpush1.bf16.msra.mxu0 %v787
    %1042 = vmatprep.subr.bf16.mxu0 %v794
    %1043 = vmatpush1.bf16.msra.mxu0 %v793
    %1044 = vmatprep.subr.bf16.mxu0 %v800
    %1045 = vmatpush1.bf16.msra.mxu0 %v799
    %1046 = vmatprep.subr.bf16.mxu0 %v806
    %1047 = vmatpush1.bf16.msra.mxu0 %v805
    %1048 = vmatprep.mubr.bf16.mxu0 %v325
    %1049 = vmatmul.mubr.bf16.gmra.mrb[0].mxu0 %v324
    %v1050 = vpop.f32.mrb[0].mxu0
    %v1051 = vadd.f32 %v923, %v1050
    %v1052 = vpop.f32.mrb[0].mxu0
    %v1053 = vadd.f32 %v927, %v1052
    %v1054 = vpop.f32.mrb[0].mxu0
    %v1055 = vpop.f32.mrb[0].mxu0
    %1056 = vdwg.mxu0
    %v1057 = vxor.u32 %v969, 2147483648
    %v1058 = vxor.u32 %v971, 2147483648
    %v1059 = vmul.f32 %v1057, 1.442695
    %v1060 = vpow.pop %v1059
    %v1061 = vmul.f32 %v1058, 1.442695
    %v1062 = vpow.pop %v1061
    %v1063 = vadd.f32 %v1060, 1.0
    %v1064 = vadd.f32 %v1062, 1.0
    %v1065 = vrcp.pop %v1063
    %v1066 = vmul.f32 1.0, %v1065
    %v1067 = vrcp.pop %v1064
    %v1068 = vmul.f32 1.0, %v1067
    %v1069 = vtanh.pop %v1010
    %v1070 = vtanh.pop %v1012
    %v1071 = vxor.u32 %v1051, 2147483648
    %v1072 = vxor.u32 %v1053, 2147483648
    %v1073 = vmul.f32 %v1071, 1.442695
    %v1074 = vpow.pop %v1073
    %v1075 = vmul.f32 %v1072, 1.442695
    %v1076 = vpow.pop %v1075
    %v1077 = vadd.f32 %v1074, 1.0
    %v1078 = vadd.f32 %v1076, 1.0
    %v1079 = vrcp.pop %v1077
    %v1080 = vmul.f32 1.0, %v1079
    %v1081 = vrcp.pop %v1078
    %v1082 = vmul.f32 1.0, %v1081
    %v1083 = vmul.f32 %v1066, %v1069
    %v1084 = vmul.f32 %v1068, %v1070
    %v1085 = vtanh.pop %v1083
    %v1086 = vtanh.pop %v1084
    %v1087 = vmul.f32 %v1080, %v1085
    %v1088 = vmul.f32 %v1082, %v1086
    %v1091 = vrot.slane %v1087, 7
    %v1092 = vrot.slane %v1088, 7
    %vm1095 = vcmask 1040384
    %v1096 = vsel %vm1095, %v322, %v1091
    %v1097 = vsel %vm1095, %v323, %v1092
    %v1100 = vcombine.low %v1096, %v1097
    %v1102 = vunpack.c.l.s4 1983009808
    %v1103 = vunpack.c.0.s8 %v1102
    %v1104 = vlaneseq
    %v1105 = vshrl.u32 %v1104, 7
    %v1106 = vsub.s32 %v1103, %v1105
    %v1107 = vrot.slane %v1100, %v1106
    %1109 = vst [vmem:[#allocation6] sm:$0xf] %v1107
    %v1112 = vrot.slane %v1083, 7
    %v1113 = vrot.slane %v1084, 7
    %v1116 = vsel %vm1095, %v318, %v1112
    %v1117 = vsel %vm1095, %v319, %v1113
    %v1120 = vcombine.low %v1116, %v1117
    %v1122 = vunpack.c.l.s4 1983009808
    %v1123 = vunpack.c.0.s8 %v1122
    %v1124 = vlaneseq
    %v1125 = vshrl.u32 %v1124, 7
    %v1126 = vsub.s32 %v1123, %v1125
    %v1127 = vrot.slane %v1120, %v1126
    %1129 = vst [vmem:[#allocation8] sm:$0xf] %v1127
    %v1130 = vpack.c.bf16 %v1087, %v1087
    %v1131 = vpack.c.bf16 %v1088, %v1088
    %v1132 = vld [vmem:[%s5] sm:$0xf]
    %v1133 = vld [vmem:[%s5 + $0x4] sm:$0xf]
    %v1134 = vld [vmem:[%s5 + $0x8] sm:$0xf]
    %v1135 = vld [vmem:[%s5 + $0xc] sm:$0xf]
    %v1136 = vld [vmem:[%s5 + $0x10] sm:$0xf]
    %v1137 = vld [vmem:[%s5 + $0x14] sm:$0xf]
    %v1138 = vld [vmem:[%s5 + $0x18] sm:$0xf]
    %v1139 = vld [vmem:[%s5 + $0x1c] sm:$0xf]
    %v1140 = vld [vmem:[%s5 + $0x20] sm:$0xf]
    %v1141 = vld [vmem:[%s5 + $0x24] sm:$0xf]
    %v1142 = vld [vmem:[%s5 + $0x28] sm:$0xf]
    %v1143 = vld [vmem:[%s5 + $0x2c] sm:$0xf]
    %v1144 = vld [vmem:[%s5 + $0x30] sm:$0xf]
    %v1145 = vld [vmem:[%s5 + $0x34] sm:$0xf]
    %v1146 = vld [vmem:[%s5 + $0x38] sm:$0xf]
    %v1147 = vld [vmem:[%s5 + $0x3c] sm:$0xf]
    %v1148 = vld [vmem:[%s5 + $0x40] sm:$0xf]
    %v1149 = vld [vmem:[%s5 + $0x44] sm:$0xf]
    %v1150 = vld [vmem:[%s5 + $0x48] sm:$0xf]
    %v1151 = vld [vmem:[%s5 + $0x4c] sm:$0xf]
    %v1152 = vld [vmem:[%s5 + $0x50] sm:$0xf]
    %v1153 = vld [vmem:[%s5 + $0x54] sm:$0xf]
    %v1154 = vld [vmem:[%s5 + $0x58] sm:$0xf]
    %v1155 = vld [vmem:[%s5 + $0x5c] sm:$0xf]
    %v1156 = vld [vmem:[%s5 + $0x60] sm:$0xf]
    %v1157 = vld [vmem:[%s5 + $0x64] sm:$0xf]
    %v1158 = vld [vmem:[%s5 + $0x68] sm:$0xf]
    %v1159 = vld [vmem:[%s5 + $0x6c] sm:$0xf]
    %v1160 = vld [vmem:[%s5 + $0x70] sm:$0xf]
    %v1161 = vld [vmem:[%s5 + $0x74] sm:$0xf]
    %v1162 = vld [vmem:[%s5 + $0x78] sm:$0xf]
    %v1163 = vld [vmem:[%s5 + $0x7c] sm:$0xf]
    %v1164 = vld [vmem:[%s6] sm:$0x1]
    %v1197 = vunpack.c.l.b16 %v1132
    %v1198 = vunpack.c.l.b16 %v1133
    %v1199 = vunpack.c.l.b16 %v1134
    %v1200 = vunpack.c.l.b16 %v1135
    %v1201 = vunpack.c.l.b16 %v1136
    %v1202 = vunpack.c.l.b16 %v1137
    %v1203 = vunpack.c.l.b16 %v1138
    %v1204 = vunpack.c.l.b16 %v1139
    %v1205 = vunpack.c.l.b16 %v1140
    %v1206 = vunpack.c.l.b16 %v1141
    %v1207 = vunpack.c.l.b16 %v1142
    %v1208 = vunpack.c.l.b16 %v1143
    %v1209 = vunpack.c.l.b16 %v1144
    %v1210 = vunpack.c.l.b16 %v1145
    %v1211 = vunpack.c.l.b16 %v1146
    %v1212 = vunpack.c.l.b16 %v1147
    %v1213 = vunpack.c.l.b16 %v1148
    %v1214 = vunpack.c.l.b16 %v1149
    %v1215 = vunpack.c.l.b16 %v1150
    %v1216 = vunpack.c.l.b16 %v1151
    %v1217 = vunpack.c.l.b16 %v1152
    %v1218 = vunpack.c.l.b16 %v1153
    %v1219 = vunpack.c.l.b16 %v1154
    %v1220 = vunpack.c.l.b16 %v1155
    %v1221 = vunpack.c.l.b16 %v1156
    %v1222 = vunpack.c.l.b16 %v1157
    %v1223 = vunpack.c.l.b16 %v1158
    %v1224 = vunpack.c.l.b16 %v1159
    %v1225 = vunpack.c.l.b16 %v1160
    %v1226 = vunpack.c.l.b16 %v1161
    %v1227 = vunpack.c.l.b16 %v1162
    %v1228 = vunpack.c.l.b16 %v1163
    %v1229 = vpack.c.b16 %v1198, %v1197
    %v1230 = vpack.c.b16 %v1200, %v1199
    %v1231 = vpack.c.b16 %v1202, %v1201
    %v1232 = vpack.c.b16 %v1204, %v1203
    %v1233 = vpack.c.b16 %v1206, %v1205
    %v1234 = vpack.c.b16 %v1208, %v1207
    %v1235 = vpack.c.b16 %v1210, %v1209
    %v1236 = vpack.c.b16 %v1212, %v1211
    %v1237 = vpack.c.b16 %v1214, %v1213
    %v1238 = vpack.c.b16 %v1216, %v1215
    %v1239 = vpack.c.b16 %v1218, %v1217
    %v1240 = vpack.c.b16 %v1220, %v1219
    %v1241 = vpack.c.b16 %v1222, %v1221
    %v1242 = vpack.c.b16 %v1224, %v1223
    %v1243 = vpack.c.b16 %v1226, %v1225
    %v1244 = vpack.c.b16 %v1228, %v1227
    %1261 = vmatprep.subr.bf16.mxu0 0
    %1262 = vmatpush1.bf16.msra.mxu0 %v1229
    %1263 = vmatprep.subr.bf16.mxu0 0
    %1264 = vmatpush1.bf16.msra.mxu0 %v1230
    %1265 = vmatprep.subr.bf16.mxu0 0
    %1266 = vmatpush1.bf16.msra.mxu0 %v1231
    %1267 = vmatprep.subr.bf16.mxu0 0
    %1268 = vmatpush1.bf16.msra.mxu0 %v1232
    %1269 = vmatprep.subr.bf16.mxu0 0
    %1270 = vmatpush1.bf16.msra.mxu0 %v1233
    %1271 = vmatprep.subr.bf16.mxu0 0
    %1272 = vmatpush1.bf16.msra.mxu0 %v1234
    %1273 = vmatprep.subr.bf16.mxu0 0
    %1274 = vmatpush1.bf16.msra.mxu0 %v1235
    %1275 = vmatprep.subr.bf16.mxu0 0
    %1276 = vmatpush1.bf16.msra.mxu0 %v1236
    %1277 = vmatprep.subr.bf16.mxu0 0
    %1278 = vmatpush1.bf16.msra.mxu0 %v1237
    %1279 = vmatprep.subr.bf16.mxu0 0
    %1280 = vmatpush1.bf16.msra.mxu0 %v1238
    %1281 = vmatprep.subr.bf16.mxu0 0
    %1282 = vmatpush1.bf16.msra.mxu0 %v1239
    %1283 = vmatprep.subr.bf16.mxu0 0
    %1284 = vmatpush1.bf16.msra.mxu0 %v1240
    %1285 = vmatprep.subr.bf16.mxu0 0
    %1286 = vmatpush1.bf16.msra.mxu0 %v1241
    %1287 = vmatprep.subr.bf16.mxu0 0
    %1288 = vmatpush1.bf16.msra.mxu0 %v1242
    %1289 = vmatprep.subr.bf16.mxu0 0
    %1290 = vmatpush1.bf16.msra.mxu0 %v1243
    %1291 = vmatprep.subr.bf16.mxu0 0
    %1292 = vmatpush1.bf16.msra.mxu0 %v1244
    %1293 = vmatprep.mubr.bf16.mxu0 %v1131
    %1294 = vmatmul.mubr.bf16.gmra.mrb[0].mxu0 %v1130
    %v1295 = vpop.f32.mrb[0].mxu0
    %v1296 = vadd.f32 %v1164, %v1295
    %v1297 = vpop.f32.mrb[0].mxu0
    %v1298 = vpop.f32.mrb[0].mxu0
    %v1299 = vpop.f32.mrb[0].mxu0
    %1300 = vdwg.mxu0
    %vm1301 = vcmask 16384
    %1302 = vst.msk [vmem:[#allocation5] sm:$0x1] %vm1301, %v1296
    // Predicated region
    $region34: #{tpu_custom_call.1} parent=1 // pred_check
      _
    $region35: #{tpu_custom_call.1} parent=1 // pred_check_branch
      %1304 = sbr.rel (0) target = $region37
    $region36: #{tpu_custom_call.1} parent=1 // pred_region
      %s1306 = ssub.s32 16, 16
      %1307 = vsyncadd [#allocation4], %s1306
      %s1309 = sshll.u32 [#allocation5], 4
      %s1310 = int_to_ptr.vmem [resolvable:$true] %s1309
      %1312 = dma.vmem_to_hbm [thread:$0]  %s1310, 16, %s7, [#allocation4]
    $region37: #{tpu_custom_call.1} parent=1 // pred_fallthru
      _
    // Predicated region
    $region38: #{tpu_custom_call.1} parent=1 // pred_check
      _
    $region39: #{tpu_custom_call.1} parent=1 // pred_check_branch
      %1314 = sbr.rel (0) target = $region41
    $region40: #{tpu_custom_call.1} parent=1 // pred_region
      %s1316 = ssub.s32 64, 64
      %1317 = vsyncadd [#allocation7], %s1316
      %s1319 = sshll.u32 [#allocation6], 4
      %s1320 = int_to_ptr.vmem [resolvable:$true] %s1319
      %1322 = dma.vmem_to_hbm [thread:$0]  %s1320, 64, %s8, [#allocation7]
    $region41: #{tpu_custom_call.1} parent=1 // pred_fallthru
      _
    // Predicated region
    $region42: #{tpu_custom_call.1} parent=1 // pred_check
      _
    $region43: #{tpu_custom_call.1} parent=1 // pred_check_branch
      %1324 = sbr.rel (0) target = $region45
    $region44: #{tpu_custom_call.1} parent=1 // pred_region
      %s1326 = ssub.s32 64, 64
      %1327 = vsyncadd [#allocation7], %s1326
      %s1329 = sshll.u32 [#allocation8], 4
      %s1330 = int_to_ptr.vmem [resolvable:$true] %s1329
      %1332 = dma.vmem_to_hbm [thread:$0]  %s1330, 64, %s9, [#allocation7]
    $region45: #{tpu_custom_call.1} parent=1 // pred_fallthru
      _
    // Predicated region
    $region46: #{tpu_custom_call.1} parent=1 // pred_check
      _
    $region47: #{tpu_custom_call.1} parent=1 // pred_check_branch
      %1334 = sbr.rel (0) target = $region49
    $region48: #{tpu_custom_call.1} parent=1 // pred_region
      %1335 = dma.done [#allocation4], 16
    $region49: #{tpu_custom_call.1} parent=1 // pred_fallthru
      _
    // Predicated region
    $region50: #{tpu_custom_call.1} parent=1 // pred_check
      _
    $region51: #{tpu_custom_call.1} parent=1 // pred_check_branch
      %1337 = sbr.rel (0) target = $region53
    $region52: #{tpu_custom_call.1} parent=1 // pred_region
      %1338 = dma.done [#allocation7], 64
    $region53: #{tpu_custom_call.1} parent=1 // pred_fallthru
      _
    // Predicated region
    $region54: #{tpu_custom_call.1} parent=1 // pred_check
      _
    $region55: #{tpu_custom_call.1} parent=1 // pred_check_branch
      %1340 = sbr.rel (0) target = $region57
    $region56: #{tpu_custom_call.1} parent=1 // pred_region
      %1341 = dma.done [#allocation7], 64
    $region57: #{tpu_custom_call.1} parent=1 // pred_fallthru
      _
    %1342 = vsyncpa [#allocation3], 1
    %1343 = vsyncpa [#allocation4], 1
    %1344 = vsyncpa [#allocation7], 1

</llo_original>
